<compile_context>
chip_gen: v5e
topology: v5e:2x2
jax: 0.10.0
libtpu: 0.0.40
codegen_flags: <defaults>
</compile_context>

<pallas_src>
import functools

import numpy as np
import jax
import jax.numpy as jnp
from jax import lax
from jax.experimental import pallas as pl
from jax.experimental.pallas import tpu as pltpu

_LANES = 128                     # vreg lane width
_MIN_PALLAS_ELEMS = 8 * _LANES   # below this, per-call overhead dominates -> pure JAX


def _default_block_rows():
    """Per-generation block size (rows of a (rows, 128) f32 tile)."""
    try:
        kind = jax.devices()[0].device_kind.lower()
    except Exception:  # pragma: no cover - backend query failure
        kind = ""
    # v5e: 16 MiB scoped-VMEM default -> keep the double-buffered footprint at ~8 MiB.
    if "v5e" in kind or ("v5" in kind and "lite" in kind):
        return 2048
    # v6e / v7x: 32 MiB scoped default -> 4096 rows is 16 MiB of f32 buffers.
    return 4096


def _is_small_int(g):
    return float(g) == int(float(g)) and 0 <= int(float(g)) <= 8


# --------------------------------------------------------------------------------------
# Pallas kernel: elementwise bi-focal loss on one (block_rows, 128) tile.
# Scalar operands arrive as (1, 1) blocks and broadcast in-kernel.
# --------------------------------------------------------------------------------------
def _bifocal_kernel(pt_ref, tgt_ref, w_ref, o_ref, *, alpha, gamma):
    pt = pt_ref[...].astype(jnp.float32)
    tgt = tgt_ref[...].astype(jnp.float32)
    w = w_ref[...].astype(jnp.float32)

    one_m_pt = 1.0 - pt
    log_pt = jnp.log(pt)          # EUP
    log_1mpt = jnp.log(one_m_pt)  # EUP

    g = float(gamma)
    if g == 0.0:
        # x ** 0 == 1 (matches torch even at pt in {0, 1})
        pow_1mpt = jnp.float32(1.0)
        pow_pt = jnp.float32(1.0)
    elif _is_small_int(g):
        # common focal settings (gamma = 1, 2, 3): VPU multiply chain, no extra EUP ops,
        # and matches torch.pow for negative bases (pt outside [0, 1]).
        e = int(g)
        pow_1mpt = lax.integer_pow(one_m_pt, e)
        pow_pt = lax.integer_pow(pt, e)
    else:
        # non-integer gamma: reuse the logs already required by the loss.
        pow_1mpt = jnp.exp(jnp.float32(g) * log_1mpt)
        pow_pt = jnp.exp(jnp.float32(g) * log_pt)

    loss = (-w * jnp.float32(alpha)) * pow_1mpt * (tgt * log_pt) \
           - jnp.float32(1.0 - alpha) * pow_pt * ((1.0 - tgt) * log_1mpt)
    o_ref[...] = loss.astype(o_ref.dtype)


# --------------------------------------------------------------------------------------
# Pure-JAX reference (the literal PyTorch expression) -- also the tiny-size fallback
# --------------------------------------------------------------------------------------
def _bifocal_ref(pt, target, weight, *, alpha, gamma):
    pt = jnp.asarray(pt, jnp.float32)
    target = jnp.asarray(target, jnp.float32)
    weight = jnp.asarray(weight, jnp.float32)
    return (-weight * alpha * jnp.power(1.0 - pt, gamma) * (target * jnp.log(pt))
            - (1.0 - alpha) * jnp.power(pt, gamma) * ((1.0 - target) * jnp.log(1.0 - pt)))


# --------------------------------------------------------------------------------------
# Wrapper: lane-dense flattening, padding for ragged sizes, scalar-aware BlockSpecs
# --------------------------------------------------------------------------------------
def volume_bifocal_loss(pt, target, weight, *, alpha, gamma, block_rows=None):
    pt = jnp.asarray(pt)
    target = jnp.asarray(target)
    weight = jnp.asarray(weight)

    out_shape = jnp.broadcast_shapes(pt.shape, target.shape, weight.shape)
    out_dtype = jnp.result_type(pt, target, weight)
    total = int(np.prod(out_shape)) if len(out_shape) else 1

    if total < _MIN_PALLAS_ELEMS:
        # tiny / empty inputs: kernel-launch + padding overhead dominates -> plain JAX
        return _bifocal_ref(pt, target, weight, alpha=alpha, gamma=gamma).astype(out_dtype)

    rows = (total + _LANES - 1) // _LANES
    padded = rows * _LANES
    if block_rows is None:
        block_rows = _default_block_rows()
    br = rows if rows <= block_rows else block_rows   # full-extent block for small inputs

    operands = []
    in_specs = []
    stream_bytes_per_step = 0
    hbm_bytes = 0
    for x, pad_val in ((pt, 0.5), (target, 0.0), (weight, 0.0)):
        if x.size == 1:
            # scalar operand: tiny resident (1,1) block, broadcast in-kernel.
            operands.append(x.reshape(1, 1))
            in_specs.append(pl.BlockSpec((1, 1), lambda i: (0, 0)))
            hbm_bytes += int(x.dtype.itemsize)
            continue
        if x.shape != out_shape:
            # TODO(synk): partially-broadcast operands (e.g. weight of shape (B,1,H,W))
            # could be streamed with their own BlockSpec instead of being materialised;
            # the flattened lane-dense view makes that nontrivial, so materialise once.
            x = jnp.broadcast_to(x, out_shape)
        flat = x.reshape(-1)
        if padded != total:
            flat = jnp.pad(flat, (0, padded - total),
                           constant_values=flat.dtype.type(pad_val))
        operands.append(flat.reshape(rows, _LANES))
        in_specs.append(pl.BlockSpec((br, _LANES), lambda i: (i, 0)))
        stream_bytes_per_step += br * _LANES * int(flat.dtype.itemsize)
        hbm_bytes += padded * int(flat.dtype.itemsize)

    out_itemsize = int(jnp.dtype(out_dtype).itemsize)
    stream_bytes_per_step += br * _LANES * out_itemsize
    hbm_bytes += padded * out_itemsize

    # double-buffered pipeline footprint + headroom for internal scratch
    vmem_limit = int(2 * stream_bytes_per_step + (16 << 20))

    n_transc = 2 if (float(gamma) == 0.0 or _is_small_int(gamma)) else 4
    cost = pl.CostEstimate(flops=15 * padded,
                           transcendentals=n_transc * padded,
                           bytes_accessed=hbm_bytes)

    kernel = functools.partial(_bifocal_kernel, alpha=float(alpha), gamma=float(gamma))
    out2 = pl.pallas_call(
        kernel,
        grid=(pl.cdiv(rows, br),),
        in_specs=in_specs,
        out_specs=pl.BlockSpec((br, _LANES), lambda i: (i, 0)),
        out_shape=jax.ShapeDtypeStruct((rows, _LANES), out_dtype),
        compiler_params=pltpu.CompilerParams(
            # elementwise => every grid step independent: shard across TCs on v7x
            dimension_semantics=("parallel",),
            vmem_limit_bytes=vmem_limit,
        ),
        cost_estimate=cost,
    )(*operands)

    flat_out = out2.reshape(-1)
    if padded != total:
        flat_out = flat_out[:total]
    return flat_out.reshape(out_shape)


class VolumeBiFocalLossPallas:
    """Drop-in equivalent of the PyTorch VolumeBiFocalLoss module."""

    def __init__(self, alpha, gamma):
        self.alpha = float(alpha)
        self.gamma = float(gamma)

    def __call__(self, pt, target, weight):
        return volume_bifocal_loss(pt, target, weight, alpha=self.alpha, gamma=self.gamma)

    forward = __call__


# --------------------------------------------------------------------------------------
# Demo / smoke test
# --------------------------------------------------------------------------------------
if __name__ == "__main__":
    key = jax.random.PRNGKey(0)
    k_pt, k_tgt, k_w, k_pt2, k_tgt2 = jax.random.split(key, 5)

    # 1) main case: small cost-volume-like shape (B, D, H, W), integer gamma
    B, D, H, W = 2, 4, 16, 16
    pt = jax.random.uniform(k_pt, (B, D, H, W), jnp.float32, 0.02, 0.98)     # probabilities
    target = jax.random.uniform(k_tgt, (B, D, H, W), jnp.float32, 0.0, 1.0)  # soft gt volume
    weight = jax.random.uniform(k_w, (B, D, H, W), jnp.float32, 0.5, 2.0)

    alpha, gamma = 0.25, 2.0
    loss_mod = VolumeBiFocalLossPallas(alpha=alpha, gamma=gamma)
    fwd = jax.jit(lambda p, t, w: loss_mod(p, t, w))
    loss = fwd(pt, target, weight)
    jax.block_until_ready(loss)
    ref = _bifocal_ref(pt, target, weight, alpha=alpha, gamma=gamma)
    np.testing.assert_allclose(np.asarray(loss), np.asarray(ref), rtol=2e-4, atol=1e-5)

    # 2) scalar weight + non-integer gamma (exercises scalar-block and exp/log-pow paths)
    w_scalar = jnp.float32(1.7)
    loss2 = jax.jit(lambda p, t, w: volume_bifocal_loss(p, t, w, alpha=0.4, gamma=1.5))(
        pt, target, w_scalar)
    jax.block_until_ready(loss2)
    ref2 = _bifocal_ref(pt, target, w_scalar, alpha=0.4, gamma=1.5)
    np.testing.assert_allclose(np.asarray(loss2), np.asarray(ref2), rtol=2e-4, atol=1e-5)

    # 3) ragged element count (exercises the pad-and-slice path)
    shape3 = (3, 5, 7, 11)   # 1155 elements, not a multiple of 128
    pt3 = jax.random.uniform(k_pt2, shape3, jnp.float32, 0.02, 0.98)
    tgt3 = jax.random.uniform(k_tgt2, shape3, jnp.float32, 0.0, 1.0)
    w3 = jnp.ones(shape3, jnp.float32)
    loss3 = jax.jit(lambda p, t, w: loss_mod(p, t, w))(pt3, tgt3, w3)
    jax.block_until_ready(loss3)
    ref3 = _bifocal_ref(pt3, tgt3, w3, alpha=alpha, gamma=gamma)
    np.testing.assert_allclose(np.asarray(loss3), np.asarray(ref3), rtol=2e-4, atol=1e-5)

    print("KERNEL_OK")
</pallas_src>

<mosaic_0001>
module attributes {stable_mosaic.version = 11 : i64} {
  func.func @_bifocal_kernel(%arg0: i32, %arg1: memref<16x128xf32, #tpu.memory_space<vmem>>, %arg2: memref<16x128xf32, #tpu.memory_space<vmem>>, %arg3: memref<16x128xf32, #tpu.memory_space<vmem>>, %arg4: memref<16x128xf32, #tpu.memory_space<vmem>>) attributes {dimension_semantics = [#tpu.dimension_semantics<parallel>], iteration_bounds = array<i64: 1>, scalar_prefetch = 0 : i64, scratch_operands = 0 : i64, tpu.core_type = #tpu.core_type<tc>, window_params = [{transform_indices = @transform_0, window_bounds = array<i64: 16, 128>}, {transform_indices = @transform_1, window_bounds = array<i64: 16, 128>}, {transform_indices = @transform_2, window_bounds = array<i64: 16, 128>}, {transform_indices = @transform_3, window_bounds = array<i64: 16, 128>}]} {
    %c0 = arith.constant 0 : index
    %c0_0 = arith.constant 0 : index
    %0 = vector.load %arg1[%c0, %c0_0] : memref<16x128xf32, #tpu.memory_space<vmem>>, vector<16x128xf32>
    %c0_1 = arith.constant 0 : index
    %c0_2 = arith.constant 0 : index
    %1 = vector.load %arg2[%c0_1, %c0_2] : memref<16x128xf32, #tpu.memory_space<vmem>>, vector<16x128xf32>
    %c0_3 = arith.constant 0 : index
    %c0_4 = arith.constant 0 : index
    %2 = vector.load %arg3[%c0_3, %c0_4] : memref<16x128xf32, #tpu.memory_space<vmem>>, vector<16x128xf32>
    %cst = arith.constant 1.000000e+00 : f32
    %3 = vector.broadcast %cst : f32 to vector<16x128xf32>
    %4 = arith.subf %3, %0 : vector<16x128xf32>
    %5 = math.log %0 : vector<16x128xf32>
    %6 = math.log %4 : vector<16x128xf32>
    %7 = arith.mulf %4, %4 : vector<16x128xf32>
    %8 = arith.mulf %0, %0 : vector<16x128xf32>
    %cst_5 = arith.constant 0.000000e+00 : f32
    %9 = vector.broadcast %cst_5 : f32 to vector<16x128xf32>
    %10 = arith.subf %9, %2 : vector<16x128xf32>
    %cst_6 = arith.constant 2.500000e-01 : f32
    %11 = vector.broadcast %cst_6 : f32 to vector<16x128xf32>
    %12 = arith.mulf %10, %11 : vector<16x128xf32>
    %13 = arith.mulf %12, %7 : vector<16x128xf32>
    %14 = arith.mulf %1, %5 : vector<16x128xf32>
    %15 = arith.mulf %13, %14 : vector<16x128xf32>
    %cst_7 = arith.constant 7.500000e-01 : f32
    %16 = vector.broadcast %cst_7 : f32 to vector<16x128xf32>
    %17 = arith.mulf %16, %8 : vector<16x128xf32>
    %cst_8 = arith.constant 1.000000e+00 : f32
    %18 = vector.broadcast %cst_8 : f32 to vector<16x128xf32>
    %19 = arith.subf %18, %1 : vector<16x128xf32>
    %20 = arith.mulf %19, %6 : vector<16x128xf32>
    %21 = arith.mulf %17, %20 : vector<16x128xf32>
    %22 = arith.subf %15, %21 : vector<16x128xf32>
    %c0_9 = arith.constant 0 : index
    %c0_10 = arith.constant 0 : index
    %23 = vector.load %arg4[%c0_9, %c0_10] : memref<16x128xf32, #tpu.memory_space<vmem>>, vector<16x128xf32>
    tpu.vector_store %arg4[%c0_9, %c0_10], %22 {strides = array<i32>} : memref<16x128xf32, #tpu.memory_space<vmem>>, vector<16x128xf32>,
    return
  }
  func.func @transform_0(%arg0: i32) -> (i32, i32) {
    %c0_i32 = arith.constant 0 : i32
    %c0_i32_0 = arith.constant 0 : i32
    return %arg0, %c0_i32 : i32, i32
  }
  func.func @transform_1(%arg0: i32) -> (i32, i32) {
    %c0_i32 = arith.constant 0 : i32
    %c0_i32_0 = arith.constant 0 : i32
    return %arg0, %c0_i32 : i32, i32
  }
  func.func @transform_2(%arg0: i32) -> (i32, i32) {
    %c0_i32 = arith.constant 0 : i32
    %c0_i32_0 = arith.constant 0 : i32
    return %arg0, %c0_i32 : i32, i32
  }
  func.func @transform_3(%arg0: i32) -> (i32, i32) {
    %c0_i32 = arith.constant 0 : i32
    %c0_i32_0 = arith.constant 0 : i32
    return %arg0, %c0_i32 : i32, i32
  }
}

</mosaic_0001>

<llo_original>
// kernel: _lambda_.1
$region0: #{_lambda_.1}
  #allocation0 [shape = 'u32[]', space=smem, size = 0x4, offset = 0x4, fixed_abs, tag = 'smem constant byte address 0x4 - core index']
  #allocation1 [shape = 'u32[72,128]{1,0:T(1,128)}', space=vmem, size = 0x9000, scoped, tag = 'internal scratch']
  %s0 = inlined_call_operand.vmem [shape: f32[16,128], index: 0, kind: input, shape index: {}]
  %s1 = inlined_call_operand.vmem [shape: f32[16,128], index: 1, kind: input, shape index: {}]
  %s2 = inlined_call_operand.vmem [shape: f32[16,128], index: 2, kind: input, shape index: {}]
  %s3 = inlined_call_operand.vmem [shape: f32[16,128], index: 3, kind: output, shape index: {}]
  %s4 = sld [smem:[#allocation0]]
  $region22: #{_lambda_.1} parent=0
    _
  %s6 = ssub.s32 1, %s4
  %s7 = scalar_select 0, %s6, %s4
  // Predicated region
  $region2: #{_lambda_.1} parent=0 // pred_check
    _
  $region3: #{_lambda_.1} parent=0 // pred_check_branch
    %9 = sbr.rel (0) target = $region5
  $region4: #{_lambda_.1} parent=0 // pred_region
    _
  $region5: #{_lambda_.1} parent=0 // pred_fallthru
    _
  // Predicated region
  $region6: #{_lambda_.1} parent=0 // pred_check
    _
  $region7: #{_lambda_.1} parent=0 // pred_check_branch
    %11 = sbr.rel (0) target = $region9
  $region8: #{_lambda_.1} parent=0 // pred_region
    _
  $region9: #{_lambda_.1} parent=0 // pred_fallthru
    _
  // Predicated region
  $region10: #{_lambda_.1} parent=0 // pred_check
    _
  $region11: #{_lambda_.1} parent=0 // pred_check_branch
    %13 = sbr.rel (0) target = $region13
  $region12: #{_lambda_.1} parent=0 // pred_region
    _
  $region13: #{_lambda_.1} parent=0 // pred_fallthru
    _
  %v14 = vld [vmem:[%s0] sm:$0xff]
  %v15 = vld [vmem:[%s0 + $0x8] sm:$0xff]
  %v16 = vld [vmem:[%s1] sm:$0xff]
  %v17 = vld [vmem:[%s1 + $0x8] sm:$0xff]
  %v18 = vld [vmem:[%s2] sm:$0xff]
  %v19 = vld [vmem:[%s2 + $0x8] sm:$0xff]
  %v20 = vsub.f32 1.0, %v14
  %v21 = vsub.f32 1.0, %v15
  %v22 = vlog2.pop %v14
  %v23 = vmul.f32 %v22, 0.6931472
  %v24 = vlog2.pop %v15
  %v25 = vmul.f32 %v24, 0.6931472
  %v26 = vlog2.pop %v20
  %v27 = vmul.f32 %v26, 0.6931472
  %v28 = vlog2.pop %v21
  %v29 = vmul.f32 %v28, 0.6931472
  %v30 = vmul.f32 %v20, %v20
  %v31 = vmul.f32 %v21, %v21
  %v32 = vmul.f32 %v14, %v14
  %v33 = vmul.f32 %v15, %v15
  %v34 = vsub.f32 0.0, %v18
  %v35 = vsub.f32 0.0, %v19
  %v36 = vmul.f32 %v34, 0.25
  %v37 = vmul.f32 %v35, 0.25
  %v38 = vmul.f32 %v36, %v30
  %v39 = vmul.f32 %v37, %v31
  %v40 = vmul.f32 %v16, %v23
  %v41 = vmul.f32 %v17, %v25
  %v42 = vmul.f32 %v38, %v40
  %v43 = vmul.f32 %v39, %v41
  %v44 = vmul.f32 %v32, 0.75
  %v45 = vmul.f32 %v33, 0.75
  %v46 = vsub.f32 1.0, %v16
  %v47 = vsub.f32 1.0, %v17
  %v48 = vmul.f32 %v46, %v27
  %v49 = vmul.f32 %v47, %v29
  %v50 = vmul.f32 %v44, %v48
  %v51 = vmul.f32 %v45, %v49
  %v52 = vsub.f32 %v42, %v50
  %v53 = vsub.f32 %v43, %v51
  %54 = vst [vmem:[%s3] sm:$0xff] %v52
  %55 = vst [vmem:[%s3 + $0x8] sm:$0xff] %v53
  // Predicated region
  $region14: #{_lambda_.1} parent=0 // pred_check
    _
  $region15: #{_lambda_.1} parent=0 // pred_check_branch
    %57 = sbr.rel (0) target = $region17
  $region16: #{_lambda_.1} parent=0 // pred_region
    _
  $region17: #{_lambda_.1} parent=0 // pred_fallthru
    _
  // Predicated region
  $region18: #{_lambda_.1} parent=0 // pred_check
    _
  $region19: #{_lambda_.1} parent=0 // pred_check_branch
    %59 = sbr.rel (0) target = $region21
  $region20: #{_lambda_.1} parent=0 // pred_region
    _
  $region21: #{_lambda_.1} parent=0 // pred_fallthru
    _

</llo_original>
